<compile_context>
chip_gen: v6e
topology: v6e:2x2x1
jax: 0.10.0
libtpu: 0.0.40
codegen_flags: <defaults>
</compile_context>

<pallas_src>
import functools

import jax
import jax.numpy as jnp
from jax.experimental import pallas as pl
from jax.experimental.pallas import tpu as pltpu


def _linear_kernel(x_ref, w_ref, b_ref, o_ref, *, apply_silu):
    # x_ref: resident [B, d_in]; w_ref/b_ref: streamed output-column tile.
    acc = jnp.dot(x_ref[...].astype(w_ref.dtype), w_ref[...],
                  preferred_element_type=jnp.float32)
    acc = acc + b_ref[...].astype(jnp.float32)
    if apply_silu:
        acc = acc * jax.nn.sigmoid(acc)          # SiLU in f32 (VPU + EUP)
    o_ref[...] = acc.astype(o_ref.dtype)


def _vmem_limit_bytes():
    # ~75% of physical VMEM: 48 MiB on v7x (64 MiB), 96 MiB on v5e/v6e (128).
    try:
        cap = pltpu.get_tpu_info().vmem_capacity_bytes
        return int(cap * 3 // 4)
    except Exception:
        return 48 * 1024 * 1024                   # conservative fallback


def _pick_tile(d_out, requested):
    if requested is not None:
        return max(1, min(requested, d_out))
    if d_out <= 1280:
        return d_out                              # single full-extent tile
    # Multiple of 256 (MXU-friendly), preferring an even tile count so the
    # v7x megacore 'parallel' split is balanced.  hidden=2560 -> 1280 (2 tiles).
    for tn in (1280, 1024, 768, 512, 256):
        if pl.cdiv(d_out, tn) % 2 == 0:
            return tn
    return 1280


def _streamed_linear(x, w, b, *, apply_silu, out_dtype, tn=None):
    """out = x @ w + b (optionally SiLU-fused), streaming w over output cols."""
    B, d_in = x.shape
    d_in_w, d_out = w.shape
    assert d_in_w == d_in
    b = b.reshape(1, d_out)

    tn = _pick_tile(d_out, tn)
    grid_n = pl.cdiv(d_out, tn)

    w_bytes = jnp.dtype(w.dtype).itemsize
    x_bytes = jnp.dtype(x.dtype).itemsize
    o_bytes = jnp.dtype(out_dtype).itemsize
    cost = pl.CostEstimate(
        flops=2 * B * d_in * d_out,
        transcendentals=(B * d_out) if apply_silu else 0,
        bytes_accessed=(d_in * d_out * w_bytes        # streamed weights
                        + B * d_in * x_bytes          # resident activation
                        + (B + 1) * d_out * o_bytes), # output + bias
    )

    kernel = functools.partial(_linear_kernel, apply_silu=apply_silu)

    return pl.pallas_call(
        kernel,
        out_shape=jax.ShapeDtypeStruct((B, d_out), out_dtype),
        grid=(grid_n,),
        in_specs=[
            # Tiny activation block: constant index_map => DMA'd once, kept
            # resident; single-buffered (no point holding two copies).
            pl.BlockSpec((B, d_in), lambda j: (0, 0),
                         pipeline_mode=pl.Buffered(1)),
            # Weight / bias tiles streamed per output-column tile; default
            # double-buffering overlaps tile j+1's DMA with tile j's dot.
            pl.BlockSpec((d_in, tn), lambda j: (0, j)),
            pl.BlockSpec((1, tn), lambda j: (0, j)),
        ],
        out_specs=pl.BlockSpec((B, tn), lambda j: (0, j)),
        compiler_params=pltpu.CompilerParams(
            # Independent output-column tiles -> both v7x TCs stream weights.
            dimension_semantics=("parallel",),
            vmem_limit_bytes=_vmem_limit_bytes(),
        ),
        cost_estimate=cost,
    )(x, w, b)


def pooled_embed_forward(x, w1, b1, w2, b2, *, tn=None):
    """PooledEmbed.forward: (silu(x @ W1 + b1)) @ W2 + b2.

    x: [B, text_emb_dim]; w1: [text_emb_dim, H]; w2: [H, H]; b1/b2: [H].
    """
    B, d_in = x.shape
    hidden = w1.shape[1]
    assert w1.shape == (d_in, hidden)
    assert w2.shape == (hidden, hidden)

    # Enforce bf16 weight streaming: the op is HBM-bound on weight bytes.
    def _to_stream_dtype(w):
        if w.dtype in (jnp.float32, jnp.float64):
            return w.astype(jnp.bfloat16)
        return w                                  # bf16 / fp8 pass through
    w1 = _to_stream_dtype(w1)
    w2 = _to_stream_dtype(w2)
    # TODO(synk): fp8(e4m3) W1/W2 on v7x would halve weight bytes again, but
    # needs a model-quality check; callers may pass fp8 weights directly.

    # Layer 1 (fused SiLU).  h kept in f32 (it is only B x H ~ 20 KB) for
    # exact parity with a fully fused implementation.
    h = _streamed_linear(x, w1, b1, apply_silu=True,
                         out_dtype=jnp.float32, tn=tn)
    # Layer 2.
    return _streamed_linear(h, w2, b2, apply_silu=False,
                            out_dtype=x.dtype, tn=tn)


def _init_params(key, text_emb_dim, hidden_size, dtype=jnp.float32):
    """Deterministic synthetic parameters (shapes from TimestepEmbedding)."""
    k1, k2, k3, k4 = jax.random.split(key, 4)
    lim1 = 1.0 / (text_emb_dim ** 0.5)
    lim2 = 1.0 / (hidden_size ** 0.5)
    w1 = jax.random.uniform(k1, (text_emb_dim, hidden_size), dtype, -lim1, lim1)
    b1 = jax.random.uniform(k2, (hidden_size,), dtype, -lim1, lim1)
    w2 = jax.random.uniform(k3, (hidden_size, hidden_size), dtype, -lim2, lim2)
    b2 = jax.random.uniform(k4, (hidden_size,), dtype, -lim2, lim2)
    return w1, b1, w2, b2


def _reference(x, w1, b1, w2, b2):
    """Mirrors the wrapper's dtype flow (bf16 weight streaming, f32 accum)."""
    if w1.dtype in (jnp.float32, jnp.float64):
        w1 = w1.astype(jnp.bfloat16)
    if w2.dtype in (jnp.float32, jnp.float64):
        w2 = w2.astype(jnp.bfloat16)
    h = jnp.dot(x.astype(w1.dtype), w1, preferred_element_type=jnp.float32)
    h = h + b1.reshape(1, -1).astype(jnp.float32)
    h = h * jax.nn.sigmoid(h)
    out = jnp.dot(h.astype(w2.dtype), w2, preferred_element_type=jnp.float32)
    out = out + b2.reshape(1, -1).astype(jnp.float32)
    return out.astype(x.dtype)


if __name__ == "__main__":
    key = jax.random.PRNGKey(0)
    k1, k2, k3, k4 = jax.random.split(key, 4)

    # Case 1: tiny module-implied shapes -> single full-extent tile per layer.
    B, d_in, hidden = 2, 64, 32
    x = jax.random.normal(k1, (B, d_in), jnp.float32)
    w1, b1, w2, b2 = _init_params(k2, d_in, hidden, jnp.float32)
    out = jax.block_until_ready(pooled_embed_forward(x, w1, b1, w2, b2))
    ref = _reference(x, w1, b1, w2, b2)
    assert out.shape == (B, hidden)
    assert jnp.allclose(out, ref, atol=2e-2, rtol=2e-2)

    # Case 2: exercise the tiled / double-buffered streaming path (grid > 1).
    B2, d_in2, hidden2 = 2, 128, 256
    x2 = jax.random.normal(k3, (B2, d_in2), jnp.float32)
    w1f, b1f, w2f, b2f = _init_params(k4, d_in2, hidden2, jnp.float32)
    out2 = jax.block_until_ready(
        pooled_embed_forward(x2, w1f, b1f, w2f, b2f, tn=128))
    ref2 = _reference(x2, w1f, b1f, w2f, b2f)
    assert out2.shape == (B2, hidden2)
    assert jnp.allclose(out2, ref2, atol=2e-2, rtol=2e-2)

    print("KERNEL_OK")
</pallas_src>

<mosaic_0001>
module attributes {stable_mosaic.version = 11 : i64} {
  func.func @_linear_kernel(%arg0: i32, %arg1: memref<2x64xf32, #tpu.memory_space<vmem>>, %arg2: memref<64x32xbf16, #tpu.memory_space<vmem>>, %arg3: memref<1x32xf32, #tpu.memory_space<vmem>>, %arg4: memref<2x32xf32, #tpu.memory_space<vmem>>) attributes {dimension_semantics = [#tpu.dimension_semantics<parallel>], iteration_bounds = array<i64: 1>, scalar_prefetch = 0 : i64, scratch_operands = 0 : i64, tpu.core_type = #tpu.core_type<tc>, window_params = [{pipeline_mode = #tpu.pipeline_mode<synchronous>, transform_indices = @transform_0, window_bounds = array<i64: 2, 64>}, {transform_indices = @transform_1, window_bounds = array<i64: 64, 32>}, {transform_indices = @transform_2, window_bounds = array<i64: 1, 32>}, {transform_indices = @transform_3, window_bounds = array<i64: 2, 32>}]} {
    %c0 = arith.constant 0 : index
    %c0_0 = arith.constant 0 : index
    %0 = vector.load %arg1[%c0, %c0_0] : memref<2x64xf32, #tpu.memory_space<vmem>>, vector<2x64xf32>
    %1 = arith.truncf %0 : vector<2x64xf32> to vector<2x64xbf16>
    %c0_1 = arith.constant 0 : index
    %c0_2 = arith.constant 0 : index
    %2 = vector.load %arg2[%c0_1, %c0_2] : memref<64x32xbf16, #tpu.memory_space<vmem>>, vector<64x32xbf16>
    %cst = arith.constant dense<0.000000e+00> : vector<2x32xf32>
    %3 = tpu.matmul %1, %2, %cst {dimension_numbers = #tpu.dot_dimension_numbers<[1], [0], [0], [1], [0, 0, 1, 1], [], []>} : vector<2x64xbf16>, vector<64x32xbf16>, vector<2x32xf32> -> vector<2x32xf32>
    %c0_3 = arith.constant 0 : index
    %c0_4 = arith.constant 0 : index
    %4 = vector.load %arg3[%c0_3, %c0_4] : memref<1x32xf32, #tpu.memory_space<vmem>>, vector<1x32xf32>
    %5 = vector.broadcast %4 : vector<1x32xf32> to vector<2x32xf32>
    %6 = arith.addf %3, %5 : vector<2x32xf32>
    %7 = arith.negf %6 : vector<2x32xf32>
    %8 = math.exp %7 : vector<2x32xf32>
    %cst_5 = arith.constant 1.000000e+00 : f32
    %9 = vector.broadcast %cst_5 : f32 to vector<2x32xf32>
    %10 = arith.addf %9, %8 : vector<2x32xf32>
    %11 = arith.divf %9, %10 : vector<2x32xf32>
    %12 = arith.mulf %6, %11 : vector<2x32xf32>
    %c0_6 = arith.constant 0 : index
    %c0_7 = arith.constant 0 : index
    %13 = vector.load %arg4[%c0_6, %c0_7] : memref<2x32xf32, #tpu.memory_space<vmem>>, vector<2x32xf32>
    tpu.vector_store %arg4[%c0_6, %c0_7], %12 {strides = array<i32>} : memref<2x32xf32, #tpu.memory_space<vmem>>, vector<2x32xf32>,
    return
  }
  func.func @transform_0(%arg0: i32) -> (i32, i32) {
    %c0_i32 = arith.constant 0 : i32
    %c0_i32_0 = arith.constant 0 : i32
    %c0_i32_1 = arith.constant 0 : i32
    return %c0_i32, %c0_i32_0 : i32, i32
  }
  func.func @transform_1(%arg0: i32) -> (i32, i32) {
    %c0_i32 = arith.constant 0 : i32
    %c0_i32_0 = arith.constant 0 : i32
    return %c0_i32, %arg0 : i32, i32
  }
  func.func @transform_2(%arg0: i32) -> (i32, i32) {
    %c0_i32 = arith.constant 0 : i32
    %c0_i32_0 = arith.constant 0 : i32
    return %c0_i32, %arg0 : i32, i32
  }
  func.func @transform_3(%arg0: i32) -> (i32, i32) {
    %c0_i32 = arith.constant 0 : i32
    %c0_i32_0 = arith.constant 0 : i32
    return %c0_i32, %arg0 : i32, i32
  }
}

</mosaic_0001>

<llo_original>
// kernel: tpu_custom_call.1
$region0: #{tpu_custom_call.1}
  #allocation0 [shape = 'u32[]', space=smem, size = 0x4, offset = 0x4, fixed_abs, tag = 'smem constant byte address 0x4 - core index']
  #allocation1 [shape = 'u32[144,128]{1,0:T(1,128)}', space=vmem, size = 0x12000, scoped, tag = 'internal scratch']
  %s0 = inlined_call_operand.vmem [shape: f32[2,64], index: 0, kind: input, shape index: {}]
  %s1 = inlined_call_operand.vmem [shape: bf16[64,32], index: 1, kind: input, shape index: {}]
  %s2 = inlined_call_operand.vmem [shape: f32[1,32], index: 2, kind: input, shape index: {}]
  %s3 = inlined_call_operand.hbm [shape: f32[2,32], index: 3, kind: output, shape index: {}]
  %s4 = sld [smem:[#allocation0]]
  $region22: #{tpu_custom_call.1} parent=0
    _
  %s6 = ssub.s32 1, %s4
  %s7 = scalar_select 0, %s6, %s4
  $region1: #{tpu_custom_call.1} parent=0
    #allocation2 [shape = 'u8[1024]{0}', space=vmem, size = 0x400, scoped, tag = 'output window, operand 0, single buffered']
    #allocation3 [shape = 's32[1]{0}', space=sflag, size = 0x4, scoped, tag = 'scoped memory for tpu_custom_call.1']
    %8 = vsyncpa [#allocation3], 0
    // Predicated region
    $region2: #{tpu_custom_call.1} parent=1 // pred_check
      _
    $region3: #{tpu_custom_call.1} parent=1 // pred_check_branch
      %10 = sbr.rel (0) target = $region5
    $region4: #{tpu_custom_call.1} parent=1 // pred_region
      _
    $region5: #{tpu_custom_call.1} parent=1 // pred_fallthru
      _
    // Predicated region
    $region6: #{tpu_custom_call.1} parent=1 // pred_check
      _
    $region7: #{tpu_custom_call.1} parent=1 // pred_check_branch
      %12 = sbr.rel (0) target = $region9
    $region8: #{tpu_custom_call.1} parent=1 // pred_region
      _
    $region9: #{tpu_custom_call.1} parent=1 // pred_fallthru
      _
    // Predicated region
    $region10: #{tpu_custom_call.1} parent=1 // pred_check
      _
    $region11: #{tpu_custom_call.1} parent=1 // pred_check_branch
      %14 = sbr.rel (0) target = $region13
    $region12: #{tpu_custom_call.1} parent=1 // pred_region
      _
    $region13: #{tpu_custom_call.1} parent=1 // pred_fallthru
      _
    %v16 = vld [vmem:[%s0] sm:$0x3]
    %v17 = vpack.c.bf16 %v16, %v16
    %v18 = vld [vmem:[%s1] sm:$0xf]
    %v19 = vld [vmem:[%s1 + $0x4] sm:$0xf]
    %v20 = vld [vmem:[%s1 + $0x8] sm:$0xf]
    %v21 = vld [vmem:[%s1 + $0xc] sm:$0xf]
    %v22 = vld [vmem:[%s1 + $0x10] sm:$0xf]
    %v23 = vld [vmem:[%s1 + $0x14] sm:$0xf]
    %v24 = vld [vmem:[%s1 + $0x18] sm:$0xf]
    %v25 = vld [vmem:[%s1 + $0x1c] sm:$0xf]
    %v26 = vld [vmem:[%s2] sm:$0x1]
    %v28 = vlaneseq
    %v29 = vshrl.u32 %v28, 7
    %v30 = vsub.s32 0, %v29
    %v31 = vrot.slane %v26, %v30
    %v41 = vunpack.c.l.b16 %v18
    %v42 = vunpack.c.l.b16 %v19
    %v43 = vunpack.c.l.b16 %v20
    %v44 = vunpack.c.l.b16 %v21
    %v45 = vunpack.c.l.b16 %v22
    %v46 = vunpack.c.l.b16 %v23
    %v47 = vunpack.c.l.b16 %v24
    %v48 = vunpack.c.l.b16 %v25
    %v49 = vpack.c.b16 %v42, %v41
    %v50 = vpack.c.b16 %v44, %v43
    %v51 = vpack.c.b16 %v46, %v45
    %v52 = vpack.c.b16 %v48, %v47
    %vm57 = vcmask 523264
    %v59 = vsel %vm57, %v17, 0
    %61 = vmatprep.subr.bf16.mxu0 0
    %62 = vmatpush1.bf16.msra.mxu0 0
    %63 = vmatprep.subr.bf16.mxu0 0
    %64 = vmatpush1.bf16.msra.mxu0 0
    %65 = vmatprep.subr.bf16.mxu0 0
    %66 = vmatpush1.bf16.msra.mxu0 0
    %67 = vmatprep.subr.bf16.mxu0 0
    %68 = vmatpush1.bf16.msra.mxu0 0
    %69 = vmatprep.subr.bf16.mxu0 0
    %70 = vmatpush1.bf16.msra.mxu0 %v52
    %71 = vmatprep.subr.bf16.mxu0 0
    %72 = vmatpush1.bf16.msra.mxu0 %v51
    %73 = vmatprep.subr.bf16.mxu0 0
    %74 = vmatpush1.bf16.msra.mxu0 %v50
    %75 = vmatprep.subr.bf16.mxu0 0
    %76 = vmatpush1.bf16.msra.mxu0 %v49
    %77 = vmatprep.subr.bf16.mxu0 0
    %78 = vmatpush2.bf16.msra.mxu0 0
    %79 = vmatprep.subr.bf16.mxu0 0
    %80 = vmatpush2.bf16.msra.mxu0 0
    %81 = vmatprep.subr.bf16.mxu0 0
    %82 = vmatpush2.bf16.msra.mxu0 0
    %83 = vmatprep.subr.bf16.mxu0 0
    %84 = vmatpush2.bf16.msra.mxu0 0
    %85 = vmatprep.subr.bf16.mxu0 0
    %86 = vmatpush2.bf16.msra.mxu0 0
    %87 = vmatprep.subr.bf16.mxu0 0
    %88 = vmatpush2.bf16.msra.mxu0 0
    %89 = vmatprep.subr.bf16.mxu0 0
    %90 = vmatpush2.bf16.msra.mxu0 0
    %91 = vmatprep.subr.bf16.mxu0 0
    %92 = vmatpush2.bf16.msra.mxu0 0
    %93 = vmatprep.mubr.bf16.mxu0 0
    %94 = vmatmul.mubr.bf16.gmra.mxu0 %v59
    %v95 = vpop.f32.mrf.mxu0
    %v96 = vadd.f32 %v31, %v95
    %v97 = vpop.f32.mrf.mxu0
    %v98 = vpop.f32.mrf.mxu0
    %v99 = vpop.f32.mrf.mxu0
    %100 = vdwg.mxu0
    %v101 = vxor.u32 %v96, 2147483648
    %v102 = vmul.f32 %v101, 1.442695
    %v103 = vpow.pop %v102
    %v104 = vadd.f32 %v103, 1.0
    %v105 = vrcp.pop %v104
    %v106 = vmul.f32 1.0, %v105
    %v107 = vmul.f32 %v96, %v106
    %vm108 = vcmask 254976
    %109 = vst.msk [vmem:[#allocation2] sm:$0x3] %vm108, %v107
    // Predicated region
    $region14: #{tpu_custom_call.1} parent=1 // pred_check
      _
    $region15: #{tpu_custom_call.1} parent=1 // pred_check_branch
      %111 = sbr.rel (0) target = $region17
    $region16: #{tpu_custom_call.1} parent=1 // pred_region
      %s113 = ssub.s32 32, 32
      %114 = vsyncadd [#allocation3], %s113
      %s116 = sshll.u32 [#allocation2], 4
      %s117 = int_to_ptr.vmem [resolvable:$true] %s116
      %119 = dma.vmem_to_hbm [thread:$0]  %s117, 32, %s3, [#allocation3]
    $region17: #{tpu_custom_call.1} parent=1 // pred_fallthru
      _
    // Predicated region
    $region18: #{tpu_custom_call.1} parent=1 // pred_check
      _
    $region19: #{tpu_custom_call.1} parent=1 // pred_check_branch
      %121 = sbr.rel (0) target = $region21
    $region20: #{tpu_custom_call.1} parent=1 // pred_region
      %122 = dma.done [#allocation3], 32
    $region21: #{tpu_custom_call.1} parent=1 // pred_fallthru
      _
    %123 = vsyncpa [#allocation3], 1

</llo_original>
